<compile_context>
chip_gen: v7x
topology: tpu7x:2x2x1
jax: 0.10.0
libtpu: 0.0.40
codegen_flags: <defaults>
</compile_context>

<pallas_src>
import jax
import jax.numpy as jnp
from jax.experimental import pallas as pl
from jax.experimental.pallas import tpu as pltpu


# ----------------------------- Pallas kernel ------------------------------ #

def _score_kernel(u_ref, i_ref, o_ref):
    """prediction[b, c] = sum_d u[b, d] * it[b, c, d] for one batch tile.

    u_ref: (TB, D) bf16/f32   i_ref: (TB, C, D) bf16/f32   o_ref: (TB, C) f32
    """
    # Cast only the small user operand; the big item tile stays packed — the
    # bf16 -> f32 promotion happens element-wise inside the fused multiply.
    u = u_ref[...].astype(jnp.float32)                     # (TB, D)
    # VPU multiply + XLU lane-reduce, f32 accumulation.  No MXU involvement.
    o_ref[...] = jnp.sum(i_ref[...] * u[:, None, :], axis=-1)


def _round_up(x: int, m: int) -> int:
    return ((x + m - 1) // m) * m


def _choose_batch_tile(B: int, C: int, D: int, itemsize: int) -> int:
    """Pick the batch tile: big DMAs, but v7x (64 MiB VMEM) safe."""
    budget = 24 << 20                           # 2x (TB, C, D) double buffer
    tb = budget // (2 * max(C * D * itemsize, 1))
    tb = max(8, min(512, (tb // 8) * 8))        # sublane-aligned, capped
    b8 = _round_up(B, 8)
    tb = min(tb, b8)                            # don't over-pad small batches
    if b8 >= 16:                                # >=2 grid steps -> both v7x TCs
        tb = min(tb, max(8, _round_up(b8 // 2, 8)))
    return tb


@jax.jit
def score_candidates(user_vecs: jax.Array, item_vecs: jax.Array) -> jax.Array:
    """user_vecs: [B, D], item_vecs: [B, C, D] -> prediction [B, C] float32."""
    B, D = user_vecs.shape
    _, C, _ = item_vecs.shape
    itemsize = jnp.dtype(item_vecs.dtype).itemsize

    TB = _choose_batch_tile(B, C, D, itemsize)
    Bp = _round_up(B, TB)

    # Pad the batch dim only (never C or D); skip the copy when not needed.
    if Bp != B:
        u_in = jnp.zeros((Bp, D), user_vecs.dtype).at[:B].set(user_vecs)
        i_in = jnp.zeros((Bp, C, D), item_vecs.dtype).at[:B].set(item_vecs)
    else:
        u_in, i_in = user_vecs, item_vecs

    # Double-buffered VMEM footprint (items + users + output) plus headroom.
    block_bytes = TB * C * D * itemsize + TB * D * itemsize + TB * C * 4
    vmem_limit = int(min(max(2 * block_bytes + (8 << 20), 32 << 20), 48 << 20))

    out = pl.pallas_call(
        _score_kernel,
        out_shape=jax.ShapeDtypeStruct((Bp, C), jnp.float32),
        grid=(Bp // TB,),
        in_specs=[
            pl.BlockSpec((TB, D), lambda b: (b, 0)),         # users
            pl.BlockSpec((TB, C, D), lambda b: (b, 0, 0)),   # candidate items
        ],
        out_specs=pl.BlockSpec((TB, C), lambda b: (b, 0)),
        compiler_params=pltpu.CompilerParams(
            dimension_semantics=("parallel",),
            vmem_limit_bytes=vmem_limit,
        ),
    )(u_in, i_in)

    return out[:B] if Bp != B else out


# ------------------------------ Model glue -------------------------------- #

class BaseModelPallas:
    """Minimal concrete realization of BaseModel's forward contract."""

    def __init__(self, n_users: int, n_items: int, emb_size: int, seed: int = 0):
        k_u, k_i = jax.random.split(jax.random.PRNGKey(seed))
        # init_weights: Embedding -> Normal(mean=0.0, std=0.01); stored bf16
        # to halve HBM traffic (kernel accumulates in f32).
        self.user_emb = (0.01 * jax.random.normal(
            k_u, (n_users, emb_size), dtype=jnp.float32)).astype(jnp.bfloat16)
        self.item_emb = (0.01 * jax.random.normal(
            k_i, (n_items, emb_size), dtype=jnp.float32)).astype(jnp.bfloat16)

    def forward(self, feed_dict: dict) -> dict:
        user_id = feed_dict["user_id"]          # [B] int32
        item_id = feed_dict["item_id"]          # [B, C] int32
        u_vecs = jnp.take(self.user_emb, user_id, axis=0)            # [B, D]
        i_vecs = jnp.take(self.item_emb, item_id.reshape(-1), axis=0)
        i_vecs = i_vecs.reshape(item_id.shape + (self.item_emb.shape[-1],))
        # TODO(synk): fuse this candidate-item gather into the kernel
        # (PrefetchScalarGridSpec + manual DMA row gather) to avoid
        # materializing the [B, C, D] tensor in HBM.
        prediction = score_candidates(u_vecs, i_vecs)                # [B, C]
        return {"prediction": prediction}


# --------------------------------- main ------------------------------------ #

if __name__ == "__main__":
    key = jax.random.PRNGKey(0)
    n_users, n_items, emb_size = 50, 100, 32
    batch_size, n_candidates = 2, 8

    model = BaseModelPallas(n_users, n_items, emb_size, seed=0)

    k1, k2 = jax.random.split(key)
    feed_dict = {
        "user_id": jax.random.randint(k1, (batch_size,), 0, n_users,
                                      dtype=jnp.int32),
        "item_id": jax.random.randint(k2, (batch_size, n_candidates), 0,
                                      n_items, dtype=jnp.int32),
        "batch_size": batch_size,
        "phase": "test",
    }

    out_dict = model.forward(feed_dict)
    pred = jax.block_until_ready(out_dict["prediction"])
    assert pred.shape == (batch_size, n_candidates)
    assert pred.dtype == jnp.float32

    # Cross-check against a plain-JAX f32 reference on the same bf16 params.
    u_ref = jnp.take(model.user_emb, feed_dict["user_id"],
                     axis=0).astype(jnp.float32)
    i_ref = jnp.take(model.item_emb, feed_dict["item_id"].reshape(-1),
                     axis=0).astype(jnp.float32)
    i_ref = i_ref.reshape(batch_size, n_candidates, emb_size)
    ref = jnp.einsum("bcd,bd->bc", i_ref, u_ref)
    assert jnp.allclose(pred, ref, atol=1e-5, rtol=1e-3)

    print("KERNEL_OK")
</pallas_src>

<mosaic_0001>
module attributes {stable_mosaic.version = 11 : i64} {
  func.func @_score_kernel(%arg0: i32, %arg1: memref<8x32xbf16, #tpu.memory_space<vmem>>, %arg2: memref<8x8x32xbf16, #tpu.memory_space<vmem>>, %arg3: memref<8x8xf32, #tpu.memory_space<vmem>>) attributes {dimension_semantics = [#tpu.dimension_semantics<parallel>], iteration_bounds = array<i64: 1>, scalar_prefetch = 0 : i64, scratch_operands = 0 : i64, tpu.core_type = #tpu.core_type<tc>, window_params = [{transform_indices = @transform_0, window_bounds = array<i64: 8, 32>}, {transform_indices = @transform_1, window_bounds = array<i64: 8, 8, 32>}, {transform_indices = @transform_2, window_bounds = array<i64: 8, 8>}]} {
    %c0 = arith.constant 0 : index
    %c0_0 = arith.constant 0 : index
    %0 = vector.load %arg1[%c0, %c0_0] : memref<8x32xbf16, #tpu.memory_space<vmem>>, vector<8x32xbf16>
    %1 = arith.extf %0 : vector<8x32xbf16> to vector<8x32xf32>
    %c0_1 = arith.constant 0 : index
    %c0_2 = arith.constant 0 : index
    %c0_3 = arith.constant 0 : index
    %2 = vector.load %arg2[%c0_1, %c0_2, %c0_3] : memref<8x8x32xbf16, #tpu.memory_space<vmem>>, vector<8x8x32xbf16>
    %3 = vector.shape_cast %1 : vector<8x32xf32> to vector<8x1x32xf32>
    %4 = arith.extf %2 : vector<8x8x32xbf16> to vector<8x8x32xf32>
    %5 = vector.broadcast %3 : vector<8x1x32xf32> to vector<8x8x32xf32>
    %6 = arith.mulf %4, %5 : vector<8x8x32xf32>
    %cst = arith.constant dense<0.000000e+00> : vector<8x8xf32>
    %7 = vector.multi_reduction <add>, %6, %cst [2] : vector<8x8x32xf32> to vector<8x8xf32>
    %c0_4 = arith.constant 0 : index
    %c0_5 = arith.constant 0 : index
    %8 = vector.load %arg3[%c0_4, %c0_5] : memref<8x8xf32, #tpu.memory_space<vmem>>, vector<8x8xf32>
    tpu.vector_store %arg3[%c0_4, %c0_5], %7 {strides = array<i32>} : memref<8x8xf32, #tpu.memory_space<vmem>>, vector<8x8xf32>,
    return
  }
  func.func @transform_0(%arg0: i32) -> (i32, i32) {
    %c0_i32 = arith.constant 0 : i32
    %c0_i32_0 = arith.constant 0 : i32
    return %arg0, %c0_i32 : i32, i32
  }
  func.func @transform_1(%arg0: i32) -> (i32, i32, i32) {
    %c0_i32 = arith.constant 0 : i32
    %c0_i32_0 = arith.constant 0 : i32
    %c0_i32_1 = arith.constant 0 : i32
    return %arg0, %c0_i32, %c0_i32_0 : i32, i32, i32
  }
  func.func @transform_2(%arg0: i32) -> (i32, i32) {
    %c0_i32 = arith.constant 0 : i32
    %c0_i32_0 = arith.constant 0 : i32
    return %arg0, %c0_i32 : i32, i32
  }
}

</mosaic_0001>

<llo_original>
// kernel: score_candidates.1
$region0: #{score_candidates.1}
  #allocation0 [shape = 'u32[]', space=smem, size = 0x4, offset = 0x4, fixed_abs, tag = 'smem constant byte address 0x4 - core index']
  #allocation1 [shape = 'u32[144,128]{1,0:T(1,128)}', space=vmem, size = 0x12000, scoped, tag = 'internal scratch']
  %s0 = inlined_call_operand.vmem [shape: bf16[8,32], index: 0, kind: input, shape index: {}]
  %s1 = inlined_call_operand.vmem [shape: bf16[8,8,32], index: 1, kind: input, shape index: {}]
  %s2 = inlined_call_operand.vmem [shape: f32[8,8], index: 2, kind: output, shape index: {}]
  %s3 = sld [smem:[#allocation0]]
  $region18: #{score_candidates.1} parent=0
    _
  %s5 = ssub.s32 1, %s3
  %s6 = scalar_select 0, %s5, %s3
  // Predicated region
  $region2: #{score_candidates.1} parent=0 // pred_check
    _
  $region3: #{score_candidates.1} parent=0 // pred_check_branch
    %8 = sbr.rel (0) target = $region5
  $region4: #{score_candidates.1} parent=0 // pred_region
    _
  $region5: #{score_candidates.1} parent=0 // pred_fallthru
    _
  // Predicated region
  $region6: #{score_candidates.1} parent=0 // pred_check
    _
  $region7: #{score_candidates.1} parent=0 // pred_check_branch
    %10 = sbr.rel (0) target = $region9
  $region8: #{score_candidates.1} parent=0 // pred_region
    _
  $region9: #{score_candidates.1} parent=0 // pred_fallthru
    _
  %v11 = vld [vmem:[%s0] sm:$0xf]
  %v12 = vunpack.c.l.bf16 %v11
  %v13 = vld [vmem:[%s1] sm:$0xf]
  %v14 = vld [vmem:[%s1 + $0x4] sm:$0xf]
  %v15 = vld [vmem:[%s1 + $0x8] sm:$0xf]
  %v16 = vld [vmem:[%s1 + $0xc] sm:$0xf]
  %v17 = vld [vmem:[%s1 + $0x10] sm:$0xf]
  %v18 = vld [vmem:[%s1 + $0x14] sm:$0xf]
  %v19 = vld [vmem:[%s1 + $0x18] sm:$0xf]
  %v20 = vld [vmem:[%s1 + $0x1c] sm:$0xf]
  %v22 = vcombine.high %v12, %v12
  %v24 = vunpack.c.l.s4 1966171168
  %v25 = vunpack.c.0.s8 %v24
  %v26 = vlaneseq
  %v27 = vshrl.u32 %v26, 7
  %v28 = vsub.s32 %v25, %v27
  %v29 = vrot.slane %v12, %v28
  %v31 = vunpack.c.l.s4 1966171168
  %v32 = vunpack.c.0.s8 %v31
  %v33 = vlaneseq
  %v34 = vshrl.u32 %v33, 7
  %v35 = vsub.s32 %v32, %v34
  %v36 = vrot.slane %v22, %v35
  %v37 = vcombine.high %v29, %v29
  %v38 = vcombine.high %v36, %v36
  %v40 = vunpack.c.l.s4 1966171168
  %v41 = vunpack.c.0.s8 %v40
  %v42 = vlaneseq
  %v43 = vshrl.u32 %v42, 7
  %v44 = vsub.s32 %v41, %v43
  %v45 = vrot.slane %v29, %v44
  %v47 = vunpack.c.l.s4 1966171168
  %v48 = vunpack.c.0.s8 %v47
  %v49 = vlaneseq
  %v50 = vshrl.u32 %v49, 7
  %v51 = vsub.s32 %v48, %v50
  %v52 = vrot.slane %v36, %v51
  %v54 = vunpack.c.l.s4 1966171168
  %v55 = vunpack.c.0.s8 %v54
  %v56 = vlaneseq
  %v57 = vshrl.u32 %v56, 7
  %v58 = vsub.s32 %v55, %v57
  %v59 = vrot.slane %v37, %v58
  %v61 = vunpack.c.l.s4 1966171168
  %v62 = vunpack.c.0.s8 %v61
  %v63 = vlaneseq
  %v64 = vshrl.u32 %v63, 7
  %v65 = vsub.s32 %v62, %v64
  %v66 = vrot.slane %v38, %v65
  %v67 = vcombine.high %v45, %v45
  %v68 = vcombine.high %v52, %v52
  %v69 = vcombine.high %v59, %v59
  %v70 = vcombine.high %v66, %v66
  %v71 = vunpack.c.l.bf16 %v13
  %v72 = vunpack.c.l.bf16 %v14
  %v73 = vunpack.c.l.bf16 %v15
  %v74 = vunpack.c.l.bf16 %v16
  %v75 = vunpack.c.l.bf16 %v17
  %v76 = vunpack.c.l.bf16 %v18
  %v77 = vunpack.c.l.bf16 %v19
  %v78 = vunpack.c.l.bf16 %v20
  %v79 = vlaneseq
  %v80 = vshrl.u32 %v79, 7
  %v81 = vsub.s32 0, %v80
  %v82 = vrot.slane %v45, %v81
  %v83 = vlaneseq
  %v84 = vshrl.u32 %v83, 7
  %v85 = vsub.s32 0, %v84
  %v86 = vrot.slane %v59, %v85
  %v87 = vlaneseq
  %v88 = vshrl.u32 %v87, 7
  %v89 = vsub.s32 0, %v88
  %v90 = vrot.slane %v67, %v89
  %v91 = vlaneseq
  %v92 = vshrl.u32 %v91, 7
  %v93 = vsub.s32 0, %v92
  %v94 = vrot.slane %v69, %v93
  %v95 = vlaneseq
  %v96 = vshrl.u32 %v95, 7
  %v97 = vsub.s32 0, %v96
  %v98 = vrot.slane %v52, %v97
  %v99 = vlaneseq
  %v100 = vshrl.u32 %v99, 7
  %v101 = vsub.s32 0, %v100
  %v102 = vrot.slane %v66, %v101
  %v103 = vlaneseq
  %v104 = vshrl.u32 %v103, 7
  %v105 = vsub.s32 0, %v104
  %v106 = vrot.slane %v68, %v105
  %v107 = vlaneseq
  %v108 = vshrl.u32 %v107, 7
  %v109 = vsub.s32 0, %v108
  %v110 = vrot.slane %v70, %v109
  %v119 = vmul.f32 %v71, %v82
  %v120 = vmul.f32 %v72, %v86
  %v121 = vmul.f32 %v73, %v90
  %v122 = vmul.f32 %v74, %v94
  %v123 = vmul.f32 %v75, %v98
  %v124 = vmul.f32 %v76, %v102
  %v125 = vmul.f32 %v77, %v106
  %v126 = vmul.f32 %v78, %v110
  %vm127 = vcmask 261120
  %v128 = vsel %vm127, %v119, 0.0
  %129 = vadd.xlane.f32.xlu0 %v128
  %v130 = vpop.xlane.xlu0 %129
  %v131 = vsel %vm127, %v120, 0.0
  %132 = vadd.xlane.f32.xlu0 %v131
  %v133 = vpop.xlane.xlu0 %132
  %v134 = vsel %vm127, %v121, 0.0
  %135 = vadd.xlane.f32.xlu0 %v134
  %v136 = vpop.xlane.xlu0 %135
  %v137 = vsel %vm127, %v122, 0.0
  %138 = vadd.xlane.f32.xlu0 %v137
  %v139 = vpop.xlane.xlu0 %138
  %v140 = vsel %vm127, %v123, 0.0
  %141 = vadd.xlane.f32.xlu0 %v140
  %v142 = vpop.xlane.xlu0 %141
  %v143 = vsel %vm127, %v124, 0.0
  %144 = vadd.xlane.f32.xlu0 %v143
  %v145 = vpop.xlane.xlu0 %144
  %v146 = vsel %vm127, %v125, 0.0
  %147 = vadd.xlane.f32.xlu0 %v146
  %v148 = vpop.xlane.xlu0 %147
  %v149 = vsel %vm127, %v126, 0.0
  %150 = vadd.xlane.f32.xlu0 %v149
  %v151 = vpop.xlane.xlu0 %150
  %v160 = vlaneseq
  %v161 = vand.u32 %v160, 127
  %v162 = vlaneseq
  %v163 = vshrl.u32 %v162, 7
  %v164 = vsub.s32 %v161, %v163
  %v165 = vrot.slane %v130, %v164
  %v166 = vlaneseq
  %v167 = vshrl.u32 %v166, 7
  %v168 = vsub.s32 %v161, %v167
  %v169 = vrot.slane %v133, %v168
  %v170 = vlaneseq
  %v171 = vshrl.u32 %v170, 7
  %v172 = vsub.s32 %v161, %v171
  %v173 = vrot.slane %v136, %v172
  %v174 = vlaneseq
  %v175 = vshrl.u32 %v174, 7
  %v176 = vsub.s32 %v161, %v175
  %v177 = vrot.slane %v139, %v176
  %v178 = vlaneseq
  %v179 = vshrl.u32 %v178, 7
  %v180 = vsub.s32 %v161, %v179
  %v181 = vrot.slane %v142, %v180
  %v182 = vlaneseq
  %v183 = vshrl.u32 %v182, 7
  %v184 = vsub.s32 %v161, %v183
  %v185 = vrot.slane %v145, %v184
  %v186 = vlaneseq
  %v187 = vshrl.u32 %v186, 7
  %v188 = vsub.s32 %v161, %v187
  %v189 = vrot.slane %v148, %v188
  %v190 = vlaneseq
  %v191 = vshrl.u32 %v190, 7
  %v192 = vsub.s32 %v161, %v191
  %v193 = vrot.slane %v151, %v192
  %vm194 = vcmask 1041409
  %v195 = vsel %vm194, %v169, %v165
  %vm196 = vcmask 1042434
  %v197 = vsel %vm196, %v173, %v195
  %vm198 = vcmask 1043459
  %v199 = vsel %vm198, %v177, %v197
  %vm200 = vcmask 1044484
  %v201 = vsel %vm200, %v181, %v199
  %vm202 = vcmask 1045509
  %v203 = vsel %vm202, %v185, %v201
  %vm204 = vcmask 1046534
  %v205 = vsel %vm204, %v189, %v203
  %vm206 = vcmask 1047559
  %v207 = vsel %vm206, %v193, %v205
  %vm209 = vcmask 64512
  %210 = vst.msk [vmem:[%s2] sm:$0xff] %vm209, %v207
  // Predicated region
  $region10: #{score_candidates.1} parent=0 // pred_check
    _
  $region11: #{score_candidates.1} parent=0 // pred_check_branch
    %212 = sbr.rel (0) target = $region13
  $region12: #{score_candidates.1} parent=0 // pred_region
    _
  $region13: #{score_candidates.1} parent=0 // pred_fallthru
    _
  // Predicated region
  $region14: #{score_candidates.1} parent=0 // pred_check
    _
  $region15: #{score_candidates.1} parent=0 // pred_check_branch
    %214 = sbr.rel (0) target = $region17
  $region16: #{score_candidates.1} parent=0 // pred_region
    _
  $region17: #{score_candidates.1} parent=0 // pred_fallthru
    _

</llo_original>
